<compile_context>
chip_gen: v7x
topology: tpu7x:2x2x1
jax: 0.10.0
libtpu: 0.0.40
codegen_flags: <defaults>
</compile_context>

<pallas_src>
import functools

import jax
import jax.numpy as jnp
import numpy as np
from jax.experimental import pallas as pl
from jax.experimental.pallas import tpu as pltpu


# ----------------------------------------------------------------------------
# In-kernel helpers
# ----------------------------------------------------------------------------
def _conv1d_same_taps(a, w_ref, *, kw, dil, matmul_dtype):
    """'same'-padded dilated conv as kw per-tap MXU matmuls, f32 accumulation.

    a:     (C_in, L) f32, already BN+ReLU'd.
    w_ref: Ref (kw, C_out, C_in), already in matmul_dtype.
    Returns (C_out, L) f32.
    """
    C, L = a.shape
    total = dil * (kw - 1)
    pad_l = total // 2
    pad_r = total - pad_l

    a_m = a.astype(matmul_dtype)                     # cast BEFORE padding
    pieces = []
    if pad_l:
        pieces.append(jnp.zeros((C, pad_l), matmul_dtype))
    pieces.append(a_m)
    if pad_r:
        pieces.append(jnp.zeros((C, pad_r), matmul_dtype))
    a_pad = jnp.concatenate(pieces, axis=1) if len(pieces) > 1 else a_m

    acc = jnp.dot(w_ref[0], a_pad[:, 0:L], preferred_element_type=jnp.float32)
    for k in range(1, kw):
        acc = acc + jnp.dot(w_ref[k], a_pad[:, k * dil:k * dil + L],
                            preferred_element_type=jnp.float32)
    return acc


# ----------------------------------------------------------------------------
# Pass 1: bn1 statistics of x (per-channel sum / sum of squares, per core)
# ----------------------------------------------------------------------------
def _stats_kernel(x_ref, s_ref, q_ref):
    @pl.when(pl.program_id(1) == 0)
    def _():
        s_ref[...] = jnp.zeros_like(s_ref)
        q_ref[...] = jnp.zeros_like(q_ref)

    x = x_ref[...]                                           # (bt, C, L) f32
    s_ref[...] += jnp.sum(jnp.sum(x, axis=2, keepdims=True), axis=0)
    q_ref[...] += jnp.sum(jnp.sum(x * x, axis=2, keepdims=True), axis=0)


# ----------------------------------------------------------------------------
# Pass 2: h1 = conv1(relu(bn1(x))) + bias1, fused bn2 statistics of h1
# ----------------------------------------------------------------------------
def _bn_conv1_kernel(x_ref, sc1_ref, sh1_ref, cb1_ref, w1_ref,
                     h1_ref, s2_ref, q2_ref,
                     *, kw, dil, matmul_dtype):
    @pl.when(pl.program_id(1) == 0)
    def _():
        s2_ref[...] = jnp.zeros_like(s2_ref)
        q2_ref[...] = jnp.zeros_like(q2_ref)

    bt = x_ref.shape[0]
    scale = sc1_ref[...]                                     # (C, 1) f32
    shift = sh1_ref[...]
    bias = cb1_ref[...]

    s_loc = jnp.zeros(s2_ref.shape, jnp.float32)
    q_loc = jnp.zeros(q2_ref.shape, jnp.float32)
    for s in range(bt):
        a = jnp.maximum(x_ref[s] * scale + shift, 0.0)       # f32 BN + ReLU
        h = _conv1d_same_taps(a, w1_ref, kw=kw, dil=dil,
                              matmul_dtype=matmul_dtype) + bias
        h1_ref[s] = h.astype(h1_ref.dtype)                   # bf16 slab write
        s_loc = s_loc + jnp.sum(h, axis=1, keepdims=True)    # stats from f32 h
        q_loc = q_loc + jnp.sum(h * h, axis=1, keepdims=True)
    s2_ref[...] += s_loc
    q2_ref[...] += q_loc


# ----------------------------------------------------------------------------
# Pass 3: out = conv2(relu(bn2(h1))) + bias2 + x
# ----------------------------------------------------------------------------
def _bn_conv2_kernel(h1_ref, sc2_ref, sh2_ref, cb2_ref, w2_ref, x_ref, out_ref,
                     *, kw, dil, matmul_dtype):
    bt = h1_ref.shape[0]
    scale = sc2_ref[...]
    shift = sh2_ref[...]
    bias = cb2_ref[...]
    for s in range(bt):
        h1 = h1_ref[s].astype(jnp.float32)
        a = jnp.maximum(h1 * scale + shift, 0.0)
        h = _conv1d_same_taps(a, w2_ref, kw=kw, dil=dil,
                              matmul_dtype=matmul_dtype) + bias
        out_ref[s] = (h + x_ref[s]).astype(out_ref.dtype)


# ----------------------------------------------------------------------------
# Wrapper
# ----------------------------------------------------------------------------
def _fold_bn(s, q, g, b, count, eps):
    """Fold train-mode BN into per-channel (scale, shift), f32, var clamped."""
    mean = s / count                                         # (C, 1)
    var = jnp.maximum(q / count - mean * mean, 0.0)
    scale = g.reshape(-1, 1).astype(jnp.float32) * jax.lax.rsqrt(var + eps)
    shift = b.reshape(-1, 1).astype(jnp.float32) - mean * scale
    return scale, shift


def _pick_samples_per_block(B, max_bt=4):
    bt = 1
    for d in range(1, min(B, max_bt) + 1):
        if B % d == 0:
            bt = d
    return bt


def residual_block(x, params, *, W, D, eps=1e-5, matmul_dtype=jnp.bfloat16,
                   samples_per_block=None):
    """x: (B, N, L) float32 (PyTorch NCL). Returns (B, N, L) float32."""
    g1, b1, w1, cb1, g2, b2, w2, cb2 = params

    B, C, L = x.shape
    count = B * L
    x = x.astype(jnp.float32)

    bt = samples_per_block or _pick_samples_per_block(B)
    if B % bt != 0:
        raise ValueError(f"samples_per_block={bt} must divide batch={B}")
    nb = B // bt
    cores = 2 if (nb % 2 == 0 and nb >= 2) else 1            # v7x megacore
    nbpc = nb // cores

    # --- parameter plumbing (tiny, done once, pre-cast to matmul dtype) -----
    # (C_out, C_in, W) -> (W, C_out, C_in): one (C,C) matmul per tap
    w1t = jnp.transpose(w1, (2, 0, 1)).astype(matmul_dtype)
    w2t = jnp.transpose(w2, (2, 0, 1)).astype(matmul_dtype)
    cb1r = cb1.reshape(C, 1).astype(jnp.float32)
    cb2r = cb2.reshape(C, 1).astype(jnp.float32)

    # --- BlockSpecs ----------------------------------------------------------
    # 2-D grid (core, batch-block) for the stat-accumulating passes
    sample_spec2 = pl.BlockSpec((bt, C, L), lambda c, b: (c * nbpc + b, 0, 0))
    stat_in_spec2 = pl.BlockSpec((C, 1), lambda c, b: (0, 0))
    stat_out_spec2 = pl.BlockSpec((None, C, 1), lambda c, b: (c, 0, 0))
    weight_spec2 = pl.BlockSpec((W, C, C), lambda c, b: (0, 0, 0))
    # 1-D grid for the final fully-parallel pass
    sample_spec1 = pl.BlockSpec((bt, C, L), lambda b: (b, 0, 0))
    stat_spec1 = pl.BlockSpec((C, 1), lambda b: (0, 0))
    weight_spec1 = pl.BlockSpec((W, C, C), lambda b: (0, 0, 0))

    vmem_limit = 32 * 1024 * 1024
    cp_acc = pltpu.CompilerParams(
        dimension_semantics=("parallel", "arbitrary"),
        vmem_limit_bytes=vmem_limit)
    cp_par = pltpu.CompilerParams(
        dimension_semantics=("parallel",),
        vmem_limit_bytes=vmem_limit)

    stat_partial_shape = jax.ShapeDtypeStruct((cores, C, 1), jnp.float32)
    h1_shape = jax.ShapeDtypeStruct((B, C, L), matmul_dtype)   # bf16 slab
    out_shape = jax.ShapeDtypeStruct((B, C, L), jnp.float32)

    # ---- pass 1: bn1 statistics of x (per-core partial sums) ---------------
    s1p, q1p = pl.pallas_call(
        _stats_kernel,
        out_shape=(stat_partial_shape, stat_partial_shape),
        grid=(cores, nbpc),
        in_specs=[sample_spec2],
        out_specs=(stat_out_spec2, stat_out_spec2),
        compiler_params=cp_acc,
    )(x)
    sc1, sh1 = _fold_bn(s1p.sum(axis=0), q1p.sum(axis=0), g1, b1, count, eps)

    # ---- pass 2: h1 = conv1(relu(bn1(x))) + bias1, fused bn2 stats ----------
    k2 = functools.partial(_bn_conv1_kernel, kw=W, dil=D,
                           matmul_dtype=matmul_dtype)
    h1, s2p, q2p = pl.pallas_call(
        k2,
        out_shape=(h1_shape, stat_partial_shape, stat_partial_shape),
        grid=(cores, nbpc),
        in_specs=[sample_spec2, stat_in_spec2, stat_in_spec2, stat_in_spec2,
                  weight_spec2],
        out_specs=(sample_spec2, stat_out_spec2, stat_out_spec2),
        compiler_params=cp_acc,
    )(x, sc1, sh1, cb1r, w1t)
    sc2, sh2 = _fold_bn(s2p.sum(axis=0), q2p.sum(axis=0), g2, b2, count, eps)

    # ---- pass 3: out = conv2(relu(bn2(h1))) + bias2 + x ---------------------
    k3 = functools.partial(_bn_conv2_kernel, kw=W, dil=D,
                           matmul_dtype=matmul_dtype)
    out = pl.pallas_call(
        k3,
        out_shape=out_shape,
        grid=(nb,),
        in_specs=[sample_spec1, stat_spec1, stat_spec1, stat_spec1,
                  weight_spec1, sample_spec1],
        out_specs=sample_spec1,
        compiler_params=cp_par,
    )(h1, sc2, sh2, cb2r, w2t, x)

    return out


# ----------------------------------------------------------------------------
# Pure-JAX reference (mirrors PyTorch train-mode forward) for validation
# ----------------------------------------------------------------------------
def residual_block_ref(x, params, *, W, D, eps=1e-5):
    g1, b1, w1, cb1, g2, b2, w2, cb2 = params

    def bn_relu(h, g, b):
        mean = h.mean(axis=(0, 2), keepdims=True)
        var = ((h - mean) ** 2).mean(axis=(0, 2), keepdims=True)
        hn = (h - mean) / jnp.sqrt(var + eps)
        return jax.nn.relu(hn * g.reshape(1, -1, 1) + b.reshape(1, -1, 1))

    def conv(h, w, cb):
        total = D * (W - 1)
        pad_l = total // 2
        pad_r = total - pad_l
        out = jax.lax.conv_general_dilated(
            h, w, window_strides=(1,), padding=[(pad_l, pad_r)],
            rhs_dilation=(D,), dimension_numbers=('NCH', 'OIH', 'NCH'))
        return out + cb.reshape(1, -1, 1)

    h = bn_relu(x, g1, b1)
    h = conv(h, w1, cb1)
    h = bn_relu(h, g2, b2)
    h = conv(h, w2, cb2)
    return h + x


# ----------------------------------------------------------------------------
if __name__ == "__main__":
    # Small shapes consistent with ResidualBlock(N, W, D) on NCL input
    B, N, L = 4, 8, 128         # batch, channels, sequence length
    W, D = 5, 2                 # kernel width, dilation

    key = jax.random.PRNGKey(0)
    ks = jax.random.split(key, 9)

    x = jax.random.normal(ks[0], (B, N, L), dtype=jnp.float32)

    # deterministic synthetic parameters (shapes follow nn.Module __init__)
    g1 = 1.0 + 0.1 * jax.random.normal(ks[1], (N,), dtype=jnp.float32)
    b1 = 0.1 * jax.random.normal(ks[2], (N,), dtype=jnp.float32)
    g2 = 1.0 + 0.1 * jax.random.normal(ks[3], (N,), dtype=jnp.float32)
    b2 = 0.1 * jax.random.normal(ks[4], (N,), dtype=jnp.float32)
    w1 = 0.1 * jax.random.normal(ks[5], (N, N, W), dtype=jnp.float32)
    cb1 = 0.1 * jax.random.normal(ks[6], (N,), dtype=jnp.float32)
    w2 = 0.1 * jax.random.normal(ks[7], (N, N, W), dtype=jnp.float32)
    cb2 = 0.1 * jax.random.normal(ks[8], (N,), dtype=jnp.float32)

    params = (g1, b1, w1, cb1, g2, b2, w2, cb2)

    ref = residual_block_ref(x, params, W=W, D=D)

    # 1) exactness check: f32 matmul operands / f32 h1 slab; exercises the
    #    2-core (parallel, arbitrary) stat grid (bt=1 -> 4 batch blocks).
    out_f32 = jax.block_until_ready(
        residual_block(x, params, W=W, D=D,
                       matmul_dtype=jnp.float32, samples_per_block=1))
    np.testing.assert_allclose(np.asarray(out_f32), np.asarray(ref),
                               rtol=1e-3, atol=1e-3)

    # 2) performance configuration: bf16 MXU operands, bf16 h1 slab,
    #    f32 accumulation, 2 samples per grid step.
    out_bf16 = jax.block_until_ready(
        residual_block(x, params, W=W, D=D,
                       matmul_dtype=jnp.bfloat16, samples_per_block=2))
    np.testing.assert_allclose(np.asarray(out_bf16), np.asarray(ref),
                               rtol=1e-1, atol=1e-1)

    print("KERNEL_OK")
</pallas_src>

<mosaic_0001>
module attributes {stable_mosaic.version = 11 : i64} {
  func.func @_stats_kernel(%arg0: i32, %arg1: i32, %arg2: memref<1x8x128xf32, #tpu.memory_space<vmem>>, %arg3: memref<1x8x1xf32, #tpu.memory_space<vmem>>, %arg4: memref<1x8x1xf32, #tpu.memory_space<vmem>>) attributes {dimension_semantics = [#tpu.dimension_semantics<parallel>, #tpu.dimension_semantics<arbitrary>], iteration_bounds = array<i64: 2, 2>, scalar_prefetch = 0 : i64, scratch_operands = 0 : i64, tpu.core_type = #tpu.core_type<tc>, window_params = [{transform_indices = @transform_0, window_bounds = array<i64: 1, 8, 128>}, {transform_indices = @transform_1, window_bounds = array<i64: 1, 8, 1>}, {transform_indices = @transform_2, window_bounds = array<i64: 1, 8, 1>}]} {
    %c0_i32 = arith.constant 0 : i32
    %0 = arith.cmpi eq, %arg1, %c0_i32 : i32
    %1 = arith.extui %0 : i1 to i32
    %c0_i32_0 = arith.constant 0 : i32
    %2 = arith.cmpi ne, %1, %c0_i32_0 : i32
    scf.if %2 {
      %cst_18 = arith.constant 0.000000e+00 : f32
      %23 = vector.broadcast %cst_18 : f32 to vector<8x1xf32>
      %c0_19 = arith.constant 0 : index
      %c0_20 = arith.constant 0 : index
      %c0_21 = arith.constant 0 : index
      %24 = vector.load %arg3[%c0_19, %c0_20, %c0_21] : memref<1x8x1xf32, #tpu.memory_space<vmem>>, vector<1x8x1xf32>
      %25 = vector.shape_cast %24 : vector<1x8x1xf32> to vector<8x1xf32>
      %26 = vector.shape_cast %23 : vector<8x1xf32> to vector<1x8x1xf32>
      tpu.vector_store %arg3[%c0_19, %c0_20, %c0_21], %26 {strides = array<i32>} : memref<1x8x1xf32, #tpu.memory_space<vmem>>, vector<1x8x1xf32>,
      %cst_22 = arith.constant 0.000000e+00 : f32
      %27 = vector.broadcast %cst_22 : f32 to vector<8x1xf32>
      %c0_23 = arith.constant 0 : index
      %c0_24 = arith.constant 0 : index
      %c0_25 = arith.constant 0 : index
      %28 = vector.load %arg4[%c0_23, %c0_24, %c0_25] : memref<1x8x1xf32, #tpu.memory_space<vmem>>, vector<1x8x1xf32>
      %29 = vector.shape_cast %28 : vector<1x8x1xf32> to vector<8x1xf32>
      %30 = vector.shape_cast %27 : vector<8x1xf32> to vector<1x8x1xf32>
      tpu.vector_store %arg4[%c0_23, %c0_24, %c0_25], %30 {strides = array<i32>} : memref<1x8x1xf32, #tpu.memory_space<vmem>>, vector<1x8x1xf32>,
    } else {
    }
    %c0 = arith.constant 0 : index
    %c0_1 = arith.constant 0 : index
    %c0_2 = arith.constant 0 : index
    %3 = vector.load %arg2[%c0, %c0_1, %c0_2] : memref<1x8x128xf32, #tpu.memory_space<vmem>>, vector<1x8x128xf32>
    %c0_3 = arith.constant 0 : index
    %c0_4 = arith.constant 0 : index
    %c0_5 = arith.constant 0 : index
    %4 = vector.load %arg3[%c0_3, %c0_4, %c0_5] : memref<1x8x1xf32, #tpu.memory_space<vmem>>, vector<1x8x1xf32>
    %5 = vector.shape_cast %4 : vector<1x8x1xf32> to vector<8x1xf32>
    %cst = arith.constant dense<0.000000e+00> : vector<1x8xf32>
    %6 = vector.multi_reduction <add>, %3, %cst [2] : vector<1x8x128xf32> to vector<1x8xf32>
    %7 = vector.shape_cast %6 : vector<1x8xf32> to vector<1x8x1xf32>
    %cst_6 = arith.constant dense<0.000000e+00> : vector<8x1xf32>
    %8 = vector.multi_reduction <add>, %7, %cst_6 [0] : vector<1x8x1xf32> to vector<8x1xf32>
    %9 = arith.addf %5, %8 : vector<8x1xf32>
    %c0_7 = arith.constant 0 : index
    %c0_8 = arith.constant 0 : index
    %c0_9 = arith.constant 0 : index
    %10 = vector.load %arg3[%c0_7, %c0_8, %c0_9] : memref<1x8x1xf32, #tpu.memory_space<vmem>>, vector<1x8x1xf32>
    %11 = vector.shape_cast %10 : vector<1x8x1xf32> to vector<8x1xf32>
    %12 = vector.shape_cast %9 : vector<8x1xf32> to vector<1x8x1xf32>
    tpu.vector_store %arg3[%c0_7, %c0_8, %c0_9], %12 {strides = array<i32>} : memref<1x8x1xf32, #tpu.memory_space<vmem>>, vector<1x8x1xf32>,
    %c0_10 = arith.constant 0 : index
    %c0_11 = arith.constant 0 : index
    %c0_12 = arith.constant 0 : index
    %13 = vector.load %arg4[%c0_10, %c0_11, %c0_12] : memref<1x8x1xf32, #tpu.memory_space<vmem>>, vector<1x8x1xf32>
    %14 = vector.shape_cast %13 : vector<1x8x1xf32> to vector<8x1xf32>
    %15 = arith.mulf %3, %3 : vector<1x8x128xf32>
    %cst_13 = arith.constant dense<0.000000e+00> : vector<1x8xf32>
    %16 = vector.multi_reduction <add>, %15, %cst_13 [2] : vector<1x8x128xf32> to vector<1x8xf32>
    %17 = vector.shape_cast %16 : vector<1x8xf32> to vector<1x8x1xf32>
    %cst_14 = arith.constant dense<0.000000e+00> : vector<8x1xf32>
    %18 = vector.multi_reduction <add>, %17, %cst_14 [0] : vector<1x8x1xf32> to vector<8x1xf32>
    %19 = arith.addf %14, %18 : vector<8x1xf32>
    %c0_15 = arith.constant 0 : index
    %c0_16 = arith.constant 0 : index
    %c0_17 = arith.constant 0 : index
    %20 = vector.load %arg4[%c0_15, %c0_16, %c0_17] : memref<1x8x1xf32, #tpu.memory_space<vmem>>, vector<1x8x1xf32>
    %21 = vector.shape_cast %20 : vector<1x8x1xf32> to vector<8x1xf32>
    %22 = vector.shape_cast %19 : vector<8x1xf32> to vector<1x8x1xf32>
    tpu.vector_store %arg4[%c0_15, %c0_16, %c0_17], %22 {strides = array<i32>} : memref<1x8x1xf32, #tpu.memory_space<vmem>>, vector<1x8x1xf32>,
    return
  }
  func.func @transform_0(%arg0: i32, %arg1: i32) -> (i32, i32, i32) {
    %c2_i32 = arith.constant 2 : i32
    %0 = arith.muli %arg0, %c2_i32 : i32
    %1 = arith.addi %0, %arg1 : i32
    %c0_i32 = arith.constant 0 : i32
    %c0_i32_0 = arith.constant 0 : i32
    %c0_i32_1 = arith.constant 0 : i32
    return %1, %c0_i32, %c0_i32_0 : i32, i32, i32
  }
  func.func @transform_1(%arg0: i32, %arg1: i32) -> (i32, i32, i32) {
    %c0_i32 = arith.constant 0 : i32
    %c0_i32_0 = arith.constant 0 : i32
    %c0_i32_1 = arith.constant 0 : i32
    return %arg0, %c0_i32, %c0_i32_0 : i32, i32, i32
  }
  func.func @transform_2(%arg0: i32, %arg1: i32) -> (i32, i32, i32) {
    %c0_i32 = arith.constant 0 : i32
    %c0_i32_0 = arith.constant 0 : i32
    %c0_i32_1 = arith.constant 0 : i32
    return %arg0, %c0_i32, %c0_i32_0 : i32, i32, i32
  }
}

</mosaic_0001>

<llo_original>
// kernel: tpu_custom_call.1
$region0: #{tpu_custom_call.1}
  #allocation0 [shape = 'u32[]', space=smem, size = 0x4, offset = 0x4, fixed_abs, tag = 'smem constant byte address 0x4 - core index']
  #allocation1 [shape = 'u32[144,128]{1,0:T(1,128)}', space=vmem, size = 0x12000, scoped, tag = 'internal scratch']
  %s0 = inlined_call_operand.hbm [shape: f32[4,8,128], index: 0, kind: input, shape index: {}]
  %s1 = inlined_call_operand.vmem [shape: f32[2,8,1], index: 1, kind: output, shape index: {0}]
  %s2 = inlined_call_operand.vmem [shape: f32[2,8,1], index: 2, kind: output, shape index: {1}]
  %3 = xla_tuple %s1, %s2
  %s4 = sld [smem:[#allocation0]]
  $region53: #{tpu_custom_call.1} parent=0
    _
  %s6 = ssub.s32 1, %s4
  %s7 = scalar_select 0, %s6, %s4
  $region1: #{tpu_custom_call.1} parent=0
    #allocation2 [shape = 'u8[8192]{0}', space=vmem, size = 0x2000, scoped, tag = 'input window, operand 0']
    #allocation3 [shape = 's32[2]{0}', space=sflag, size = 0x8, scoped, tag = 'scoped memory for tpu_custom_call.1']
    %8 = vsyncpa [#allocation3], 0
    %s9 = scalar_lea.sflag [#allocation3], 1
    %10 = vsyncpa %s9, 0
    loop: start=0, step=1, limit=6
    $region2: #{tpu_custom_call.1} parent=1 // loop_pre_header
      _
    $region3: #{tpu_custom_call.1} parent=1 // loop_header
      %s12 = sphi 0, %s16
      %p13 = scmp.ge.s32.totalorder %s12, 6
      %s19 = sphi 0, %s31
      %s20 = sphi 0, %s27
      %s21 = sphi 0, %s19
      %s22 = sphi 0, %s20
      %s23 = sphi 0, %s21
      %s24 = sphi 0, %s22
      %s38 = sphi 0, %s40
      %s41 = sphi 0, %s38
      %s42 = sphi 0, %s41
      %s58 = sphi 0, %s42
      %s64 = sphi 0, %s66
      %s67 = sphi 0, %s64
      %s68 = sphi 0, %s67
      %s84 = sphi 0, %s68
      %s90 = sphi 0, %s92
      %s93 = sphi 0, %s90
      %s94 = sphi 0, %s93
      %s110 = sphi 0, %s94
    $region4: #{tpu_custom_call.1} parent=1 // loop_header_branch
      %15 = sbr.rel (%p13) target = $region8
    $region5: #{tpu_custom_call.1} parent=1 // loop_body
      %s17 = ssub.s32 %s12, 1
      %s18 = ssub.s32 %s12, 2
      %s25 = sadd.s32 1, %s20
      %p26 = scmp.ge.s32.totalorder %s25, 2
      %s27 = scalar_select %p26, 0, %s25
      %s28 = sadd.s32 1, %s19
      %s29 = scalar_select %p26, %s28, %s19
      %p30 = scmp.ge.s32.totalorder %s29, 2
      %s31 = scalar_select %p30, 0, %s29
      %s32 = smul.u32 %s19, 2
      %s33 = sadd.s32 %s32, %s20
      %s34 = smul.u32 %s31, 2
      %s35 = sadd.s32 %s34, %s27
      %s36 = ssub.s32 %s33, %s35
      %p37 = scmp.eq.s32.totalorder %s36, 0
      %s39 = sadd.s32 %s38, 1
      %s40 = scalar_select %p37, %s38, %s39
      %p43 = pneg %p37
      %p44 = scmp.eq.s32.totalorder %s12, 3
      %p45 = por %p43, %p44
      %p46 = scmp.ne.s32.totalorder %s38, %s41
      %p47 = scmp.eq.s32.totalorder %s12, 0
      %p48 = por %p46, %p47
      %p49 = scmp.ne.s32.totalorder %s38, %s41
      %p50 = scmp.eq.s32.totalorder %s17, 3
      %p51 = por %p49, %p50
      %p52 = scmp.ne.s32.totalorder %s41, %s42
      %p53 = scmp.eq.s32.totalorder %s17, 0
      %p54 = por %p52, %p53
      %p55 = scmp.ne.s32.totalorder %s41, %s42
      %p56 = scmp.eq.s32.totalorder %s18, 3
      %p57 = por %p55, %p56
      %p59 = scmp.ne.s32.totalorder %s42, %s58
      %p60 = scmp.eq.s32.totalorder %s18, 0
      %p61 = por %p59, %p60
      %s62 = ssub.s32 %s19, %s31
      %p63 = scmp.eq.s32.totalorder %s62, 0
      %s65 = sadd.s32 %s64, 1
      %s66 = scalar_select %p63, %s64, %s65
      %p69 = pneg %p63
      %p70 = scmp.eq.s32.totalorder %s12, 3
      %p71 = por %p69, %p70
      %p72 = scmp.ne.s32.totalorder %s64, %s67
      %p73 = scmp.eq.s32.totalorder %s12, 0
      %p74 = por %p72, %p73
      %p75 = scmp.ne.s32.totalorder %s64, %s67
      %p76 = scmp.eq.s32.totalorder %s17, 3
      %p77 = por %p75, %p76
      %p78 = scmp.ne.s32.totalorder %s67, %s68
      %p79 = scmp.eq.s32.totalorder %s17, 0
      %p80 = por %p78, %p79
      %p81 = scmp.ne.s32.totalorder %s67, %s68
      %p82 = scmp.eq.s32.totalorder %s18, 3
      %p83 = por %p81, %p82
      %p85 = scmp.ne.s32.totalorder %s68, %s84
      %p86 = scmp.eq.s32.totalorder %s18, 0
      %p87 = por %p85, %p86
      %s88 = ssub.s32 %s19, %s31
      %p89 = scmp.eq.s32.totalorder %s88, 0
      %s91 = sadd.s32 %s90, 1
      %s92 = scalar_select %p89, %s90, %s91
      %p95 = pneg %p89
      %p96 = scmp.eq.s32.totalorder %s12, 3
      %p97 = por %p95, %p96
      %p98 = scmp.ne.s32.totalorder %s90, %s93
      %p99 = scmp.eq.s32.totalorder %s12, 0
      %p100 = por %p98, %p99
      %p101 = scmp.ne.s32.totalorder %s90, %s93
      %p102 = scmp.eq.s32.totalorder %s17, 3
      %p103 = por %p101, %p102
      %p104 = scmp.ne.s32.totalorder %s93, %s94
      %p105 = scmp.eq.s32.totalorder %s17, 0
      %p106 = por %p104, %p105
      %p107 = scmp.ne.s32.totalorder %s93, %s94
      %p108 = scmp.eq.s32.totalorder %s18, 3
      %p109 = por %p107, %p108
      %p111 = scmp.ne.s32.totalorder %s94, %s110
      %p112 = scmp.eq.s32.totalorder %s18, 0
      %p113 = por %p111, %p112
      %p114 = scmp.le.s32.totalorder 1, %s12
      %p115 = scmp.lt.s32.totalorder %s12, 5
      %p116 = pnand %p114, %p115
      %p117 = pneg %p116
      // Predicated region
      $region9: #{tpu_custom_call.1} parent=5 // pred_check
        _
      $region10: #{tpu_custom_call.1} parent=5 // pred_check_branch
        %119 = sbr.rel (%p116) target = $region12
      $region11: #{tpu_custom_call.1} parent=5 // pred_region
        %s120 = ssub.s32 %s12, 1
      $region12: #{tpu_custom_call.1} parent=5 // pred_fallthru
        _
      %p121 = scmp.lt.s32.totalorder %s12, 4
      // Predicated region
      $region13: #{tpu_custom_call.1} parent=5 // pred_check
        %p122 = pneg %p121
      $region14: #{tpu_custom_call.1} parent=5 // pred_check_branch
        %124 = sbr.rel (%p122) target = $region16
      $region15: #{tpu_custom_call.1} parent=5 // pred_region
        // Predicated region
        $region17: #{tpu_custom_call.1} parent=15 // pred_check
          %p125 = pneg %p48
        $region18: #{tpu_custom_call.1} parent=15 // pred_check_branch
          %127 = sbr.rel (%p125) target = $region20
        $region19: #{tpu_custom_call.1} parent=15 // pred_region
          %s128 = sand.u32 %s38, 1
          %s129 = scalar_lea.sflag [#allocation3], %s128
          %s130 = sand.u32 %s38, 1
          %s131 = smul.addr %s130, 8
          %s132 = scalar_lea.vmem [#allocation2], %s131
          %s133 = smul.u32 %s19, 2
          %s134 = sadd.s32 %s133, %s20
          %s136 = ssub.s32 128, 128
          %137 = vsyncadd %s129, %s136
          %s138 = smul.addr %s134, 128
          %s139 = scalar_lea.hbm %s0, %s138
          %s141 = sshll.u32 %s132, 4
          %s142 = int_to_ptr.vmem [resolvable:$true] %s141
          %144 = dma.hbm_to_vmem [thread:$0]  %s139, 128, %s142, %s129
        $region20: #{tpu_custom_call.1} parent=15 // pred_fallthru
          _
      $region16: #{tpu_custom_call.1} parent=5 // pred_fallthru
        _
      %p145 = scmp.le.s32.totalorder 1, %s12
      %p146 = scmp.lt.s32.totalorder %s12, 5
      %p147 = pnand %p145, %p146
      %p148 = pneg %p147
      // Predicated region
      $region21: #{tpu_custom_call.1} parent=5 // pred_check
        _
      $region22: #{tpu_custom_call.1} parent=5 // pred_check_branch
        %150 = sbr.rel (%p147) target = $region24
      $region23: #{tpu_custom_call.1} parent=5 // pred_region
        %s151 = ssub.s32 %s12, 1
        %s152 = sand.u32 %s41, 1
        %s153 = scalar_lea.sflag [#allocation3], %s152
        %s154 = sand.u32 %s41, 1
        %s155 = smul.addr %s154, 8
        %s156 = scalar_lea.vmem [#allocation2], %s155
        // Predicated region
        $region25: #{tpu_custom_call.1} parent=23 // pred_check
          %p157 = pneg %p54
        $region26: #{tpu_custom_call.1} parent=23 // pred_check_branch
          %159 = sbr.rel (%p157) target = $region28
        $region27: #{tpu_custom_call.1} parent=23 // pred_region
          %160 = dma.done %s153, 128
        $region28: #{tpu_custom_call.1} parent=23 // pred_fallthru
          _
        %s161 = sand.u32 %s41, 1
        %s162 = scalar_lea.sflag [#allocation3], %s161
        %s163 = sand.u32 %s41, 1
        %s164 = smul.addr %s163, 8
        %s165 = scalar_lea.vmem [#allocation2], %s164
        %p166 = pneg %p54
        %p167 = pneg %p51
        %p168 = pneg %p80
        %p169 = pneg %p77
        %p170 = scmp.lt.s32.totalorder %s21, 1
        %s171 = scalar_select %p170, %s21, 1
        %s172 = smul.addr %s171, 8
        %s173 = scalar_lea.vmem %s1, %s172
        %p174 = pneg %p106
        %p175 = pneg %p103
        %p176 = scmp.lt.s32.totalorder %s21, 1
        %s177 = scalar_select %p176, %s21, 1
        %s178 = smul.addr %s177, 8
        %s179 = scalar_lea.vmem %s2, %s178
        %s180 = smul.u32 %s21, 2
        %s181 = sadd.s32 %s180, %s22
        %p182 = scmp.lt.s32.totalorder %s21, 1
        %s183 = scalar_select %p182, %s21, 1
        %s184 = smul.addr %s183, 8
        %s185 = scalar_lea.vmem %s1, %s184
        %p186 = scmp.lt.s32.totalorder %s21, 1
        %s187 = scalar_select %p186, %s21, 1
        %s188 = smul.addr %s187, 8
        %s189 = scalar_lea.vmem %s2, %s188
        %p190 = scmp.eq.s32.totalorder %s22, 0
        // Predicated region
        $region29: #{tpu_custom_call.1} parent=23 // pred_check
          %p191 = pneg %p190
        $region30: #{tpu_custom_call.1} parent=23 // pred_check_branch
          %193 = sbr.rel (%p191) target = $region32
        $region31: #{tpu_custom_call.1} parent=23 // pred_region
          %vm194 = vcmask 7168
          %195 = vst.msk [vmem:[%s185] sm:$0xff] %vm194, 0.0
          %196 = vst.msk [vmem:[%s189] sm:$0xff] %vm194, 0.0
        $region32: #{tpu_custom_call.1} parent=23 // pred_fallthru
          _
        %v197 = vld [vmem:[%s156] sm:$0xff]
        %v198 = vld [vmem:[%s185] sm:$0xff]
        %199 = vadd.xlane.f32.xlu0 %v197
        %v200 = vpop.xlane.xlu0 %199
        %v201 = vadd.f32 %v200, 0.0
        %v202 = vadd.f32 %v198, %v201
        %vm203 = vcmask 7168
        %204 = vst.msk [vmem:[%s185] sm:$0xff] %vm203, %v202
        %v205 = vld [vmem:[%s189] sm:$0xff]
        %v206 = vmul.f32 %v197, %v197
        %207 = vadd.xlane.f32.xlu0 %v206
        %v208 = vpop.xlane.xlu0 %207
        %v209 = vadd.f32 %v208, 0.0
        %v210 = vadd.f32 %v205, %v209
        %211 = vst.msk [vmem:[%s189] sm:$0xff] %vm203, %v210
        %p212 = scmp.lt.s32.totalorder %s21, 1
        %s213 = scalar_select %p212, %s21, 1
        %s214 = smul.addr %s213, 8
        %s215 = scalar_lea.vmem %s1, %s214
        %p216 = scmp.lt.s32.totalorder %s21, 1
        %s217 = scalar_select %p216, %s21, 1
        %s218 = smul.addr %s217, 8
        %s219 = scalar_lea.vmem %s2, %s218
        // Predicated region
        $region33: #{tpu_custom_call.1} parent=23 // pred_check
          %p220 = pneg %p77
        $region34: #{tpu_custom_call.1} parent=23 // pred_check_branch
          %222 = sbr.rel (%p220) target = $region36
        $region35: #{tpu_custom_call.1} parent=23 // pred_region
          _
        $region36: #{tpu_custom_call.1} parent=23 // pred_fallthru
          _
        // Predicated region
        $region37: #{tpu_custom_call.1} parent=23 // pred_check
          %p223 = pneg %p103
        $region38: #{tpu_custom_call.1} parent=23 // pred_check_branch
          %225 = sbr.rel (%p223) target = $region40
        $region39: #{tpu_custom_call.1} parent=23 // pred_region
          _
        $region40: #{tpu_custom_call.1} parent=23 // pred_fallthru
          _
      $region24: #{tpu_custom_call.1} parent=5 // pred_fallthru
        _
      %p226 = scmp.le.s32.totalorder 2, %s12
      // Predicated region
      $region41: #{tpu_custom_call.1} parent=5 // pred_check
        %p227 = pneg %p226
      $region42: #{tpu_custom_call.1} parent=5 // pred_check_branch
        %229 = sbr.rel (%p227) target = $region44
      $region43: #{tpu_custom_call.1} parent=5 // pred_region
        %s230 = ssub.s32 %s12, 2
        // Predicated region
        $region45: #{tpu_custom_call.1} parent=43 // pred_check
          %p231 = pneg %p83
        $region46: #{tpu_custom_call.1} parent=43 // pred_check_branch
          %233 = sbr.rel (%p231) target = $region48
        $region47: #{tpu_custom_call.1} parent=43 // pred_region
          %p234 = scmp.lt.s32.totalorder %s23, 1
          %s235 = scalar_select %p234, %s23, 1
          %s236 = smul.addr %s235, 8
          %s237 = scalar_lea.vmem %s1, %s236
        $region48: #{tpu_custom_call.1} parent=43 // pred_fallthru
          _
        // Predicated region
        $region49: #{tpu_custom_call.1} parent=43 // pred_check
          %p238 = pneg %p109
        $region50: #{tpu_custom_call.1} parent=43 // pred_check_branch
          %240 = sbr.rel (%p238) target = $region52
        $region51: #{tpu_custom_call.1} parent=43 // pred_region
          %p241 = scmp.lt.s32.totalorder %s23, 1
          %s242 = scalar_select %p241, %s23, 1
          %s243 = smul.addr %s242, 8
          %s244 = scalar_lea.vmem %s2, %s243
        $region52: #{tpu_custom_call.1} parent=43 // pred_fallthru
          _
      $region44: #{tpu_custom_call.1} parent=5 // pred_fallthru
        _
    $region6: #{tpu_custom_call.1} parent=1 // loop_footer
      %s16 = sadd.s32 1, %s12
    $region7: #{tpu_custom_call.1} parent=1 // loop_footer_branch
      %11 = sbr.rel target = $region3
    $region8: #{tpu_custom_call.1} parent=1 // loop_exit
      _
    %245 = vsyncpa [#allocation3], 1
    %s246 = scalar_lea.sflag [#allocation3], 1
    %247 = vsyncpa %s246, 1

</llo_original>
